<compile_context>
chip_gen: v7x
topology: tpu7x:2x2x1
jax: 0.10.0
libtpu: 0.0.40
codegen_flags: <defaults>
</compile_context>

<pallas_src>
import functools

import jax
import jax.numpy as jnp
from jax.experimental import pallas as pl
from jax.experimental.pallas import tpu as pltpu


# -------------------------- small helpers --------------------------


def _slice(arr, axis, start, size, stride=1):
    """Static (optionally strided) slice of `size` elements along `axis`."""
    limit = start + (size - 1) * stride + 1
    return jax.lax.slice_in_dim(arr, start, limit, stride=stride, axis=axis)


def _min3(a, b, c):
    return jnp.minimum(jnp.minimum(a, b), c)


def _max3(a, b, c):
    return jnp.maximum(jnp.maximum(a, b), c)


def _med3(a, b, c):
    lo = jnp.minimum(a, b)
    hi = jnp.maximum(a, b)
    return jnp.maximum(lo, jnp.minimum(hi, c))


def _load_padded(x_ref, xp_ref, pads, h_axis, w_axis):
    """Return the (reflect-)padded plane block.

    With zero padding this is a plain load.  Otherwise the halo is synthesized
    in the VMEM scratch `xp_ref` (channels-last layout, h_axis=0, w_axis=1)
    from single row/column copies, so the unpadded tensor never makes an extra
    HBM round trip (PyTorch F.pad 'reflect' semantics, separable in H/W).
    """
    pad_t, pad_b, pad_l, pad_r = pads
    if not any(pads):
        return x_ref[...]
    assert (h_axis, w_axis) == (0, 1) and xp_ref is not None
    x = x_ref[...]                                   # (H, W, bc)
    H, W = x.shape[0], x.shape[1]
    # interior
    xp_ref[pad_t:pad_t + H, pad_l:pad_l + W, :] = x
    # top / bottom halo rows (reflect excludes the edge row itself)
    for i in range(pad_t):
        xp_ref[i, pad_l:pad_l + W, :] = x[pad_t - i]
    for i in range(pad_b):
        xp_ref[pad_t + H + i, pad_l:pad_l + W, :] = x[H - 2 - i]
    # left / right halo columns; read back from the scratch so the corners are
    # the reflection of the already H-reflected rows (2-D reflect is separable)
    for j in range(pad_l):
        xp_ref[:, j, :] = xp_ref[:, 2 * pad_l - j, :]
    for j in range(pad_r):
        xp_ref[:, pad_l + W + j, :] = xp_ref[:, pad_l + W - 2 - j, :]
    return xp_ref[...]


# -------------------------- kernels --------------------------


def _median3x3_s1_kernel(x_ref, o_ref, *scratch, Ho, Wo, h_axis, w_axis, pads):
    """Fast path: 3x3 window, stride 1."""
    x = _load_padded(x_ref, scratch[0] if scratch else None, pads, h_axis, w_axis)

    # vertical sort-of-3 per column (shared by all horizontal offsets)
    a = _slice(x, h_axis, 0, Ho)
    b = _slice(x, h_axis, 1, Ho)
    c = _slice(x, h_axis, 2, Ho)
    lo_ab = jnp.minimum(a, b)
    hi_ab = jnp.maximum(a, b)
    v_lo = jnp.minimum(lo_ab, c)                       # column minimum
    v_md = jnp.maximum(lo_ab, jnp.minimum(hi_ab, c))   # column median
    v_hi = jnp.maximum(hi_ab, c)                       # column maximum

    def col(arr, dx):
        return _slice(arr, w_axis, dx, Wo)

    # med9 = med3( max of mins, med3 of medians, min of maxs )
    lo_m = _max3(col(v_lo, 0), col(v_lo, 1), col(v_lo, 2))
    hi_m = _min3(col(v_hi, 0), col(v_hi, 1), col(v_hi, 2))
    md_m = _med3(col(v_md, 0), col(v_md, 1), col(v_md, 2))
    med = _med3(lo_m, md_m, hi_m)
    o_ref[...] = med.astype(o_ref.dtype)


def _median_generic_kernel(x_ref, o_ref, *scratch, kh, kw, sh, sw, Ho, Wo,
                           h_axis, w_axis, pads):
    """Any kernel size / stride: streaming selection with a bounded live set."""
    x = _load_padded(x_ref, scratch[0] if scratch else None, pads, h_axis, w_axis)

    n = kh * kw
    m = (n - 1) // 2      # torch.median returns the lower of the two middles

    # TODO(synk): strided slices (sh/sw > 1) land on outer/sublane axes in the
    # channels-last layout; verify Mosaic lowering of the strided path before
    # relying on it (only stride=1 is exercised below).
    def tap(dy, dx):
        t = _slice(x, h_axis, dy, Ho, sh)
        return _slice(t, w_axis, dx, Wo, sw)

    # Keep only the (m+1) smallest values seen so far, sorted ascending.  Live
    # planes <= m+2 (vs kh*kw for a bubble network), so 5x5+ windows stay in
    # vregs instead of spilling to VMEM.
    best = []
    for dy in range(kh):
        for dx in range(kw):
            v = tap(dy, dx)
            if len(best) <= m:
                t = v                              # grow the sorted list
                keep = best
            else:
                t = jnp.minimum(best[-1], v)       # overall max is discarded
                keep = best[:-1]
            merged = []
            for b in reversed(keep):
                merged.append(jnp.maximum(b, t))
                t = jnp.minimum(b, t)
            merged.append(t)
            best = list(reversed(merged))
    o_ref[...] = best[m].astype(o_ref.dtype)


# -------------------------- blocking / wrapper --------------------------


def _tpu_config():
    """Generation-aware (vmem_budget_bytes, tensorcores_per_chip)."""
    try:
        vmem_phys = int(pltpu.get_tpu_info().vmem_capacity_bytes)
    except Exception:            # unknown backend -> be conservative
        vmem_phys = 64 * 1024 * 1024
    # v7x: 64 MiB VMEM and 2 TensorCores/chip; v5e/v6e: 128 MiB and 1 TC.
    two_tc = vmem_phys <= 96 * 1024 * 1024
    budget = (28 if two_tc else 48) * 1024 * 1024
    return budget, (2 if two_tc else 1)


def _pick_block_channels(NC, per_ch_bytes, budget_bytes, num_tc):
    """Channels per grid step.  On the lane axis the only legal block sizes are
    multiples of 128 or the full NC extent; the grid uses cdiv so NC need not
    be divisible by the block size (ragged tail handled by Pallas)."""
    want = int(max(1, budget_bytes // max(per_ch_bytes, 1)))
    if want >= NC:
        bc = NC
        if num_tc >= 2 and NC >= 2 * 128:
            # split a single all-channels block so both TensorCores get work
            bc = ((NC + 1) // 2 + 127) // 128 * 128
    else:
        bc = max(128, (want // 128) * 128)
    bc = min(bc, NC)
    if num_tc >= 2 and bc > 128:
        steps = pl.cdiv(NC, bc)
        if steps > 1 and steps % 2 == 1:
            # prefer an even step count so no core idles on an odd tail
            bc_even = (pl.cdiv(NC, steps + 1) + 127) // 128 * 128
            if 128 <= bc_even < bc:
                bc = bc_even
    return bc


def median_pool2d(x, kernel_size=3, stride=1, padding=0, same=False):
    """Pallas equivalent of MedianPool2d.forward on NCHW input."""
    kh, kw = (kernel_size, kernel_size) if isinstance(kernel_size, int) else tuple(kernel_size)
    sh, sw = (stride, stride) if isinstance(stride, int) else tuple(stride)
    pad = (padding,) * 4 if isinstance(padding, int) else tuple(padding)

    N, C, H, W = x.shape
    if same:
        ph = max(kh - sh, 0) if H % sh == 0 else max(kh - H % sh, 0)
        pw = max(kw - sw, 0) if W % sw == 0 else max(kw - W % sw, 0)
        pad = (pw // 2, pw - pw // 2, ph // 2, ph - ph // 2)
    pad_l, pad_r, pad_t, pad_b = pad
    if max(pad_t, pad_b) >= H or max(pad_l, pad_r) >= W:
        raise ValueError("reflect padding must be smaller than the input size")

    Hp, Wp = H + pad_t + pad_b, W + pad_l + pad_r
    Ho = (Hp - kh) // sh + 1
    Wo = (Wp - kw) // sw + 1
    NC = N * C
    itemsize = jnp.dtype(x.dtype).itemsize

    fast = (kh == 3 and kw == 3 and sh == 1 and sw == 1)
    n_live = 6 if fast else ((kh * kw - 1) // 2 + 2)

    budget, num_tc = _tpu_config()
    # VMEM working set per channel: double-buffered in/out blocks + padded
    # scratch plane + live intermediate planes (everything stays in x.dtype).
    per_ch = itemsize * (2 * H * W + 2 * Ho * Wo + Hp * Wp
                         + n_live * Ho * max(Wp, Wo) + 4 * Ho * Wo)

    # Channels-last whenever the image is too narrow to fill the 128 lanes.
    channels_last = Wp < 128
    bc = _pick_block_channels(NC, per_ch, budget, num_tc)
    vmem_limit = budget
    if per_ch > budget:
        # TODO(synk): H-tile with a (kh-1)-row halo so one plane never has to
        # fit VMEM whole (needed for very large images, esp. v7x's 64 MiB).
        channels_last = False
        bc = 1
        vmem_limit = min(max(budget, 2 * per_ch), 100 * 1024 * 1024)

    h_axis, w_axis = (0, 1) if channels_last else (1, 2)

    if channels_last:
        pads_k = (pad_t, pad_b, pad_l, pad_r)            # fused reflect pad
        scratch_shapes = [pltpu.VMEM((Hp, Wp, bc), x.dtype)] if any(pads_k) else []
        xf = jnp.transpose(x.reshape(NC, H, W), (1, 2, 0))   # (H, W, NC)
        in_spec = pl.BlockSpec((H, W, bc), lambda i: (0, 0, i))
        out_spec = pl.BlockSpec((Ho, Wo, bc), lambda i: (0, 0, i))
        out_shape = jax.ShapeDtypeStruct((Ho, Wo, NC), x.dtype)
    else:
        # TODO(synk): fuse the reflect pad for the wide-image / huge-plane path
        # too (needs halo synthesis along the lane axis); pre-padded in HBM.
        pads_k = (0, 0, 0, 0)
        scratch_shapes = []
        if any((pad_t, pad_b, pad_l, pad_r)):
            x = jnp.pad(x, ((0, 0), (0, 0), (pad_t, pad_b), (pad_l, pad_r)),
                        mode="reflect")
        xf = x.reshape(NC, Hp, Wp)
        in_spec = pl.BlockSpec((bc, Hp, Wp), lambda i: (i, 0, 0))
        out_spec = pl.BlockSpec((bc, Ho, Wo), lambda i: (i, 0, 0))
        out_shape = jax.ShapeDtypeStruct((NC, Ho, Wo), x.dtype)

    if fast:
        kern = functools.partial(_median3x3_s1_kernel, Ho=Ho, Wo=Wo,
                                 h_axis=h_axis, w_axis=w_axis, pads=pads_k)
        flops_per_px = 20
    else:
        kern = functools.partial(_median_generic_kernel, kh=kh, kw=kw, sh=sh,
                                 sw=sw, Ho=Ho, Wo=Wo,
                                 h_axis=h_axis, w_axis=w_axis, pads=pads_k)
        flops_per_px = 2 * kh * kw * ((kh * kw - 1) // 2 + 1)

    out = pl.pallas_call(
        kern,
        out_shape=out_shape,
        grid=(pl.cdiv(NC, bc),),
        in_specs=[in_spec],
        out_specs=out_spec,
        scratch_shapes=scratch_shapes,
        compiler_params=pltpu.CompilerParams(
            dimension_semantics=("parallel",),
            vmem_limit_bytes=vmem_limit,      # same number the picker used
        ),
        cost_estimate=pl.CostEstimate(
            flops=int(flops_per_px) * NC * Ho * Wo,
            transcendentals=0,
            bytes_accessed=NC * (H * W + Ho * Wo) * itemsize,
        ),
    )(xf)

    if channels_last:
        return jnp.transpose(out, (2, 0, 1)).reshape(N, C, Ho, Wo)
    return out.reshape(N, C, Ho, Wo)


# -------------------------- pure-JAX reference --------------------------


def _median_pool2d_ref(x, kernel_size=3, stride=1, padding=0, same=False):
    """Pure-JAX reference mirroring the PyTorch module (unfold + median)."""
    kh, kw = (kernel_size, kernel_size) if isinstance(kernel_size, int) else tuple(kernel_size)
    sh, sw = (stride, stride) if isinstance(stride, int) else tuple(stride)
    pad = (padding,) * 4 if isinstance(padding, int) else tuple(padding)
    N, C, H, W = x.shape
    if same:
        ph = max(kh - sh, 0) if H % sh == 0 else max(kh - H % sh, 0)
        pw = max(kw - sw, 0) if W % sw == 0 else max(kw - W % sw, 0)
        pad = (pw // 2, pw - pw // 2, ph // 2, ph - ph // 2)
    pad_l, pad_r, pad_t, pad_b = pad
    if any(p > 0 for p in (pad_l, pad_r, pad_t, pad_b)):
        x = jnp.pad(x, ((0, 0), (0, 0), (pad_t, pad_b), (pad_l, pad_r)), mode="reflect")
    _, _, Hp, Wp = x.shape
    Ho = (Hp - kh) // sh + 1
    Wo = (Wp - kw) // sw + 1
    wins = []
    for dy in range(kh):
        for dx in range(kw):
            wins.append(
                x[:, :, dy: dy + (Ho - 1) * sh + 1: sh, dx: dx + (Wo - 1) * sw + 1: sw]
            )
    stacked = jnp.stack(wins, axis=-1)
    srt = jnp.sort(stacked, axis=-1)
    return srt[..., (kh * kw - 1) // 2]


if __name__ == "__main__":
    key = jax.random.PRNGKey(0)
    x = jax.random.normal(key, (2, 4, 16, 16), dtype=jnp.float32)

    configs = [
        dict(kernel_size=3, stride=1, padding=0, same=False),  # fast 3x3 path
        dict(kernel_size=3, stride=1, padding=0, same=True),   # fused reflect pad
        dict(kernel_size=5, stride=1, padding=0, same=False),  # generic streaming path
    ]
    for cfg in configs:
        out = jax.block_until_ready(median_pool2d(x, **cfg))
        ref = _median_pool2d_ref(x, **cfg)
        assert out.shape == ref.shape, (cfg, out.shape, ref.shape)
        assert jnp.allclose(out, ref), f"mismatch vs. reference for {cfg}"

    print("KERNEL_OK")
</pallas_src>

<mosaic_0001>
module attributes {stable_mosaic.version = 11 : i64} {
  func.func @_median3x3_s1_kernel(%arg0: i32, %arg1: memref<16x16x8xf32, #tpu.memory_space<vmem>>, %arg2: memref<14x14x8xf32, #tpu.memory_space<vmem>>) attributes {dimension_semantics = [#tpu.dimension_semantics<parallel>], iteration_bounds = array<i64: 1>, scalar_prefetch = 0 : i64, scratch_operands = 0 : i64, tpu.core_type = #tpu.core_type<tc>, window_params = [{transform_indices = @transform_0, window_bounds = array<i64: 16, 16, 8>}, {transform_indices = @transform_1, window_bounds = array<i64: 14, 14, 8>}]} {
    %c0 = arith.constant 0 : index
    %c0_0 = arith.constant 0 : index
    %c0_1 = arith.constant 0 : index
    %0 = vector.load %arg1[%c0, %c0_0, %c0_1] : memref<16x16x8xf32, #tpu.memory_space<vmem>>, vector<16x16x8xf32>
    %1 = vector.extract_strided_slice %0 {offsets = [0, 0, 0], sizes = [14, 16, 8], strides = [1, 1, 1]} : vector<16x16x8xf32> to vector<14x16x8xf32>
    %2 = vector.extract_strided_slice %0 {offsets = [1, 0, 0], sizes = [14, 16, 8], strides = [1, 1, 1]} : vector<16x16x8xf32> to vector<14x16x8xf32>
    %3 = vector.extract_strided_slice %0 {offsets = [2, 0, 0], sizes = [14, 16, 8], strides = [1, 1, 1]} : vector<16x16x8xf32> to vector<14x16x8xf32>
    %4 = arith.minimumf %1, %2 : vector<14x16x8xf32>
    %5 = arith.maximumf %1, %2 : vector<14x16x8xf32>
    %6 = arith.minimumf %4, %3 : vector<14x16x8xf32>
    %7 = arith.minimumf %5, %3 : vector<14x16x8xf32>
    %8 = arith.maximumf %4, %7 : vector<14x16x8xf32>
    %9 = arith.maximumf %5, %3 : vector<14x16x8xf32>
    %10 = vector.extract_strided_slice %6 {offsets = [0, 0, 0], sizes = [14, 14, 8], strides = [1, 1, 1]} : vector<14x16x8xf32> to vector<14x14x8xf32>
    %11 = vector.extract_strided_slice %6 {offsets = [0, 1, 0], sizes = [14, 14, 8], strides = [1, 1, 1]} : vector<14x16x8xf32> to vector<14x14x8xf32>
    %12 = vector.extract_strided_slice %6 {offsets = [0, 2, 0], sizes = [14, 14, 8], strides = [1, 1, 1]} : vector<14x16x8xf32> to vector<14x14x8xf32>
    %13 = arith.maximumf %10, %11 : vector<14x14x8xf32>
    %14 = arith.maximumf %13, %12 : vector<14x14x8xf32>
    %15 = vector.extract_strided_slice %9 {offsets = [0, 0, 0], sizes = [14, 14, 8], strides = [1, 1, 1]} : vector<14x16x8xf32> to vector<14x14x8xf32>
    %16 = vector.extract_strided_slice %9 {offsets = [0, 1, 0], sizes = [14, 14, 8], strides = [1, 1, 1]} : vector<14x16x8xf32> to vector<14x14x8xf32>
    %17 = vector.extract_strided_slice %9 {offsets = [0, 2, 0], sizes = [14, 14, 8], strides = [1, 1, 1]} : vector<14x16x8xf32> to vector<14x14x8xf32>
    %18 = arith.minimumf %15, %16 : vector<14x14x8xf32>
    %19 = arith.minimumf %18, %17 : vector<14x14x8xf32>
    %20 = vector.extract_strided_slice %8 {offsets = [0, 0, 0], sizes = [14, 14, 8], strides = [1, 1, 1]} : vector<14x16x8xf32> to vector<14x14x8xf32>
    %21 = vector.extract_strided_slice %8 {offsets = [0, 1, 0], sizes = [14, 14, 8], strides = [1, 1, 1]} : vector<14x16x8xf32> to vector<14x14x8xf32>
    %22 = vector.extract_strided_slice %8 {offsets = [0, 2, 0], sizes = [14, 14, 8], strides = [1, 1, 1]} : vector<14x16x8xf32> to vector<14x14x8xf32>
    %23 = arith.minimumf %20, %21 : vector<14x14x8xf32>
    %24 = arith.maximumf %20, %21 : vector<14x14x8xf32>
    %25 = arith.minimumf %24, %22 : vector<14x14x8xf32>
    %26 = arith.maximumf %23, %25 : vector<14x14x8xf32>
    %27 = arith.minimumf %14, %26 : vector<14x14x8xf32>
    %28 = arith.maximumf %14, %26 : vector<14x14x8xf32>
    %29 = arith.minimumf %28, %19 : vector<14x14x8xf32>
    %30 = arith.maximumf %27, %29 : vector<14x14x8xf32>
    %c0_2 = arith.constant 0 : index
    %c0_3 = arith.constant 0 : index
    %c0_4 = arith.constant 0 : index
    %31 = vector.load %arg2[%c0_2, %c0_3, %c0_4] : memref<14x14x8xf32, #tpu.memory_space<vmem>>, vector<14x14x8xf32>
    tpu.vector_store %arg2[%c0_2, %c0_3, %c0_4], %30 {strides = array<i32>} : memref<14x14x8xf32, #tpu.memory_space<vmem>>, vector<14x14x8xf32>,
    return
  }
  func.func @transform_0(%arg0: i32) -> (i32, i32, i32) {
    %c0_i32 = arith.constant 0 : i32
    %c0_i32_0 = arith.constant 0 : i32
    %c0_i32_1 = arith.constant 0 : i32
    return %c0_i32, %c0_i32_0, %arg0 : i32, i32, i32
  }
  func.func @transform_1(%arg0: i32) -> (i32, i32, i32) {
    %c0_i32 = arith.constant 0 : i32
    %c0_i32_0 = arith.constant 0 : i32
    %c0_i32_1 = arith.constant 0 : i32
    return %c0_i32, %c0_i32_0, %arg0 : i32, i32, i32
  }
}

</mosaic_0001>

<llo_original>
// kernel: tpu_custom_call.1
$region0: #{tpu_custom_call.1}
  #allocation0 [shape = 'u32[]', space=smem, size = 0x4, offset = 0x4, fixed_abs, tag = 'smem constant byte address 0x4 - core index']
  #allocation1 [shape = 'u32[144,128]{1,0:T(1,128)}', space=vmem, size = 0x12000, scoped, tag = 'internal scratch']
  %s0 = inlined_call_operand.vmem [shape: f32[16,16,8], index: 0, kind: input, shape index: {}]
  %s1 = inlined_call_operand.vmem [shape: f32[14,14,8], index: 1, kind: output, shape index: {}]
  %s2 = sld [smem:[#allocation0]]
  $region14: #{tpu_custom_call.1} parent=0
    _
  %s4 = ssub.s32 1, %s2
  %s5 = scalar_select 0, %s4, %s2
  // Predicated region
  $region2: #{tpu_custom_call.1} parent=0 // pred_check
    _
  $region3: #{tpu_custom_call.1} parent=0 // pred_check_branch
    %7 = sbr.rel (0) target = $region5
  $region4: #{tpu_custom_call.1} parent=0 // pred_region
    _
  $region5: #{tpu_custom_call.1} parent=0 // pred_fallthru
    _
  %v8 = vld [vmem:[%s0] sm:$0xff]
  %v9 = vld [vmem:[%s0 + $0x8] sm:$0xff]
  %v10 = vld [vmem:[%s0 + $0x10] sm:$0xff]
  %v11 = vld [vmem:[%s0 + $0x18] sm:$0xff]
  %v12 = vld [vmem:[%s0 + $0x20] sm:$0xff]
  %v13 = vld [vmem:[%s0 + $0x28] sm:$0xff]
  %v14 = vld [vmem:[%s0 + $0x30] sm:$0xff]
  %v15 = vld [vmem:[%s0 + $0x38] sm:$0xff]
  %v16 = vld [vmem:[%s0 + $0x40] sm:$0xff]
  %v17 = vld [vmem:[%s0 + $0x48] sm:$0xff]
  %v18 = vld [vmem:[%s0 + $0x50] sm:$0xff]
  %v19 = vld [vmem:[%s0 + $0x58] sm:$0xff]
  %v20 = vld [vmem:[%s0 + $0x60] sm:$0xff]
  %v21 = vld [vmem:[%s0 + $0x68] sm:$0xff]
  %v22 = vld [vmem:[%s0 + $0x70] sm:$0xff]
  %v23 = vld [vmem:[%s0 + $0x78] sm:$0xff]
  %v24 = vld [vmem:[%s0 + $0x80] sm:$0xff]
  %v25 = vld [vmem:[%s0 + $0x88] sm:$0xff]
  %v26 = vld [vmem:[%s0 + $0x90] sm:$0xff]
  %v27 = vld [vmem:[%s0 + $0x98] sm:$0xff]
  %v28 = vld [vmem:[%s0 + $0xa0] sm:$0xff]
  %v29 = vld [vmem:[%s0 + $0xa8] sm:$0xff]
  %v30 = vld [vmem:[%s0 + $0xb0] sm:$0xff]
  %v31 = vld [vmem:[%s0 + $0xb8] sm:$0xff]
  %v32 = vld [vmem:[%s0 + $0xc0] sm:$0xff]
  %v33 = vld [vmem:[%s0 + $0xc8] sm:$0xff]
  %v34 = vld [vmem:[%s0 + $0xd0] sm:$0xff]
  %v35 = vld [vmem:[%s0 + $0xd8] sm:$0xff]
  %v36 = vld [vmem:[%s0 + $0xe0] sm:$0xff]
  %v37 = vld [vmem:[%s0 + $0xe8] sm:$0xff]
  %v38 = vld [vmem:[%s0 + $0xf0] sm:$0xff]
  %v39 = vld [vmem:[%s0 + $0xf8] sm:$0xff]
  %v40 = vmin.f32 %v8, %v10
  %v41 = vmin.f32 %v9, %v11
  %v42 = vmin.f32 %v10, %v12
  %v43 = vmin.f32 %v11, %v13
  %v44 = vmin.f32 %v12, %v14
  %v45 = vmin.f32 %v13, %v15
  %v46 = vmin.f32 %v14, %v16
  %v47 = vmin.f32 %v15, %v17
  %v48 = vmin.f32 %v16, %v18
  %v49 = vmin.f32 %v17, %v19
  %v50 = vmin.f32 %v18, %v20
  %v51 = vmin.f32 %v19, %v21
  %v52 = vmin.f32 %v20, %v22
  %v53 = vmin.f32 %v21, %v23
  %v54 = vmin.f32 %v22, %v24
  %v55 = vmin.f32 %v23, %v25
  %v56 = vmin.f32 %v24, %v26
  %v57 = vmin.f32 %v25, %v27
  %v58 = vmin.f32 %v26, %v28
  %v59 = vmin.f32 %v27, %v29
  %v60 = vmin.f32 %v28, %v30
  %v61 = vmin.f32 %v29, %v31
  %v62 = vmin.f32 %v30, %v32
  %v63 = vmin.f32 %v31, %v33
  %v64 = vmin.f32 %v32, %v34
  %v65 = vmin.f32 %v33, %v35
  %v66 = vmin.f32 %v34, %v36
  %v67 = vmin.f32 %v35, %v37
  %v68 = vmax.f32 %v8, %v10
  %v69 = vmax.f32 %v9, %v11
  %v70 = vmax.f32 %v10, %v12
  %v71 = vmax.f32 %v11, %v13
  %v72 = vmax.f32 %v12, %v14
  %v73 = vmax.f32 %v13, %v15
  %v74 = vmax.f32 %v14, %v16
  %v75 = vmax.f32 %v15, %v17
  %v76 = vmax.f32 %v16, %v18
  %v77 = vmax.f32 %v17, %v19
  %v78 = vmax.f32 %v18, %v20
  %v79 = vmax.f32 %v19, %v21
  %v80 = vmax.f32 %v20, %v22
  %v81 = vmax.f32 %v21, %v23
  %v82 = vmax.f32 %v22, %v24
  %v83 = vmax.f32 %v23, %v25
  %v84 = vmax.f32 %v24, %v26
  %v85 = vmax.f32 %v25, %v27
  %v86 = vmax.f32 %v26, %v28
  %v87 = vmax.f32 %v27, %v29
  %v88 = vmax.f32 %v28, %v30
  %v89 = vmax.f32 %v29, %v31
  %v90 = vmax.f32 %v30, %v32
  %v91 = vmax.f32 %v31, %v33
  %v92 = vmax.f32 %v32, %v34
  %v93 = vmax.f32 %v33, %v35
  %v94 = vmax.f32 %v34, %v36
  %v95 = vmax.f32 %v35, %v37
  %v96 = vmin.f32 %v40, %v12
  %v97 = vmin.f32 %v41, %v13
  %v98 = vmin.f32 %v42, %v14
  %v99 = vmin.f32 %v43, %v15
  %v100 = vmin.f32 %v44, %v16
  %v101 = vmin.f32 %v45, %v17
  %v102 = vmin.f32 %v46, %v18
  %v103 = vmin.f32 %v47, %v19
  %v104 = vmin.f32 %v48, %v20
  %v105 = vmin.f32 %v49, %v21
  %v106 = vmin.f32 %v50, %v22
  %v107 = vmin.f32 %v51, %v23
  %v108 = vmin.f32 %v52, %v24
  %v109 = vmin.f32 %v53, %v25
  %v110 = vmin.f32 %v54, %v26
  %v111 = vmin.f32 %v55, %v27
  %v112 = vmin.f32 %v56, %v28
  %v113 = vmin.f32 %v57, %v29
  %v114 = vmin.f32 %v58, %v30
  %v115 = vmin.f32 %v59, %v31
  %v116 = vmin.f32 %v60, %v32
  %v117 = vmin.f32 %v61, %v33
  %v118 = vmin.f32 %v62, %v34
  %v119 = vmin.f32 %v63, %v35
  %v120 = vmin.f32 %v64, %v36
  %v121 = vmin.f32 %v65, %v37
  %v122 = vmin.f32 %v66, %v38
  %v123 = vmin.f32 %v67, %v39
  %v124 = vmin.f32 %v68, %v12
  %v125 = vmin.f32 %v69, %v13
  %v126 = vmin.f32 %v70, %v14
  %v127 = vmin.f32 %v71, %v15
  %v128 = vmin.f32 %v72, %v16
  %v129 = vmin.f32 %v73, %v17
  %v130 = vmin.f32 %v74, %v18
  %v131 = vmin.f32 %v75, %v19
  %v132 = vmin.f32 %v76, %v20
  %v133 = vmin.f32 %v77, %v21
  %v134 = vmin.f32 %v78, %v22
  %v135 = vmin.f32 %v79, %v23
  %v136 = vmin.f32 %v80, %v24
  %v137 = vmin.f32 %v81, %v25
  %v138 = vmin.f32 %v82, %v26
  %v139 = vmin.f32 %v83, %v27
  %v140 = vmin.f32 %v84, %v28
  %v141 = vmin.f32 %v85, %v29
  %v142 = vmin.f32 %v86, %v30
  %v143 = vmin.f32 %v87, %v31
  %v144 = vmin.f32 %v88, %v32
  %v145 = vmin.f32 %v89, %v33
  %v146 = vmin.f32 %v90, %v34
  %v147 = vmin.f32 %v91, %v35
  %v148 = vmin.f32 %v92, %v36
  %v149 = vmin.f32 %v93, %v37
  %v150 = vmin.f32 %v94, %v38
  %v151 = vmin.f32 %v95, %v39
  %v152 = vmax.f32 %v40, %v124
  %v153 = vmax.f32 %v41, %v125
  %v154 = vmax.f32 %v42, %v126
  %v155 = vmax.f32 %v43, %v127
  %v156 = vmax.f32 %v44, %v128
  %v157 = vmax.f32 %v45, %v129
  %v158 = vmax.f32 %v46, %v130
  %v159 = vmax.f32 %v47, %v131
  %v160 = vmax.f32 %v48, %v132
  %v161 = vmax.f32 %v49, %v133
  %v162 = vmax.f32 %v50, %v134
  %v163 = vmax.f32 %v51, %v135
  %v164 = vmax.f32 %v52, %v136
  %v165 = vmax.f32 %v53, %v137
  %v166 = vmax.f32 %v54, %v138
  %v167 = vmax.f32 %v55, %v139
  %v168 = vmax.f32 %v56, %v140
  %v169 = vmax.f32 %v57, %v141
  %v170 = vmax.f32 %v58, %v142
  %v171 = vmax.f32 %v59, %v143
  %v172 = vmax.f32 %v60, %v144
  %v173 = vmax.f32 %v61, %v145
  %v174 = vmax.f32 %v62, %v146
  %v175 = vmax.f32 %v63, %v147
  %v176 = vmax.f32 %v64, %v148
  %v177 = vmax.f32 %v65, %v149
  %v178 = vmax.f32 %v66, %v150
  %v179 = vmax.f32 %v67, %v151
  %v180 = vmax.f32 %v68, %v12
  %v181 = vmax.f32 %v69, %v13
  %v182 = vmax.f32 %v70, %v14
  %v183 = vmax.f32 %v71, %v15
  %v184 = vmax.f32 %v72, %v16
  %v185 = vmax.f32 %v73, %v17
  %v186 = vmax.f32 %v74, %v18
  %v187 = vmax.f32 %v75, %v19
  %v188 = vmax.f32 %v76, %v20
  %v189 = vmax.f32 %v77, %v21
  %v190 = vmax.f32 %v78, %v22
  %v191 = vmax.f32 %v79, %v23
  %v192 = vmax.f32 %v80, %v24
  %v193 = vmax.f32 %v81, %v25
  %v194 = vmax.f32 %v82, %v26
  %v195 = vmax.f32 %v83, %v27
  %v196 = vmax.f32 %v84, %v28
  %v197 = vmax.f32 %v85, %v29
  %v198 = vmax.f32 %v86, %v30
  %v199 = vmax.f32 %v87, %v31
  %v200 = vmax.f32 %v88, %v32
  %v201 = vmax.f32 %v89, %v33
  %v202 = vmax.f32 %v90, %v34
  %v203 = vmax.f32 %v91, %v35
  %v204 = vmax.f32 %v92, %v36
  %v205 = vmax.f32 %v93, %v37
  %v206 = vmax.f32 %v94, %v38
  %v207 = vmax.f32 %v95, %v39
  %vm236 = vcmask 1046528
  %v237 = vrot.slane %v96, 1
  %v238 = vrot.slane %v97, 1
  %v239 = vsel %vm236, %v237, %v238
  %v240 = vrot.slane %v98, 1
  %v241 = vrot.slane %v99, 1
  %v242 = vsel %vm236, %v240, %v241
  %v243 = vrot.slane %v100, 1
  %v244 = vrot.slane %v101, 1
  %v245 = vsel %vm236, %v243, %v244
  %v246 = vrot.slane %v102, 1
  %v247 = vrot.slane %v103, 1
  %v248 = vsel %vm236, %v246, %v247
  %v249 = vrot.slane %v104, 1
  %v250 = vrot.slane %v105, 1
  %v251 = vsel %vm236, %v249, %v250
  %v252 = vrot.slane %v106, 1
  %v253 = vrot.slane %v107, 1
  %v254 = vsel %vm236, %v252, %v253
  %v255 = vrot.slane %v108, 1
  %v256 = vrot.slane %v109, 1
  %v257 = vsel %vm236, %v255, %v256
  %v258 = vrot.slane %v110, 1
  %v259 = vrot.slane %v111, 1
  %v260 = vsel %vm236, %v258, %v259
  %v261 = vrot.slane %v112, 1
  %v262 = vrot.slane %v113, 1
  %v263 = vsel %vm236, %v261, %v262
  %v264 = vrot.slane %v114, 1
  %v265 = vrot.slane %v115, 1
  %v266 = vsel %vm236, %v264, %v265
  %v267 = vrot.slane %v116, 1
  %v268 = vrot.slane %v117, 1
  %v269 = vsel %vm236, %v267, %v268
  %v270 = vrot.slane %v118, 1
  %v271 = vrot.slane %v119, 1
  %v272 = vsel %vm236, %v270, %v271
  %v273 = vrot.slane %v120, 1
  %v274 = vrot.slane %v121, 1
  %v275 = vsel %vm236, %v273, %v274
  %v276 = vrot.slane %v122, 1
  %v277 = vrot.slane %v123, 1
  %v278 = vsel %vm236, %v276, %v277
  %v307 = vmax.f32 %v96, %v239
  %v308 = vmax.f32 %v97, %v238
  %v309 = vmax.f32 %v98, %v242
  %v310 = vmax.f32 %v99, %v241
  %v311 = vmax.f32 %v100, %v245
  %v312 = vmax.f32 %v101, %v244
  %v313 = vmax.f32 %v102, %v248
  %v314 = vmax.f32 %v103, %v247
  %v315 = vmax.f32 %v104, %v251
  %v316 = vmax.f32 %v105, %v250
  %v317 = vmax.f32 %v106, %v254
  %v318 = vmax.f32 %v107, %v253
  %v319 = vmax.f32 %v108, %v257
  %v320 = vmax.f32 %v109, %v256
  %v321 = vmax.f32 %v110, %v260
  %v322 = vmax.f32 %v111, %v259
  %v323 = vmax.f32 %v112, %v263
  %v324 = vmax.f32 %v113, %v262
  %v325 = vmax.f32 %v114, %v266
  %v326 = vmax.f32 %v115, %v265
  %v327 = vmax.f32 %v116, %v269
  %v328 = vmax.f32 %v117, %v268
  %v329 = vmax.f32 %v118, %v272
  %v330 = vmax.f32 %v119, %v271
  %v331 = vmax.f32 %v120, %v275
  %v332 = vmax.f32 %v121, %v274
  %v333 = vmax.f32 %v122, %v278
  %v334 = vmax.f32 %v123, %v277
  %vm335 = vcmask 1045504
  %v336 = vrot.slane %v96, 2
  %v337 = vrot.slane %v97, 2
  %v338 = vsel %vm335, %v336, %v337
  %v339 = vrot.slane %v98, 2
  %v340 = vrot.slane %v99, 2
  %v341 = vsel %vm335, %v339, %v340
  %v342 = vrot.slane %v100, 2
  %v343 = vrot.slane %v101, 2
  %v344 = vsel %vm335, %v342, %v343
  %v345 = vrot.slane %v102, 2
  %v346 = vrot.slane %v103, 2
  %v347 = vsel %vm335, %v345, %v346
  %v348 = vrot.slane %v104, 2
  %v349 = vrot.slane %v105, 2
  %v350 = vsel %vm335, %v348, %v349
  %v351 = vrot.slane %v106, 2
  %v352 = vrot.slane %v107, 2
  %v353 = vsel %vm335, %v351, %v352
  %v354 = vrot.slane %v108, 2
  %v355 = vrot.slane %v109, 2
  %v356 = vsel %vm335, %v354, %v355
  %v357 = vrot.slane %v110, 2
  %v358 = vrot.slane %v111, 2
  %v359 = vsel %vm335, %v357, %v358
  %v360 = vrot.slane %v112, 2
  %v361 = vrot.slane %v113, 2
  %v362 = vsel %vm335, %v360, %v361
  %v363 = vrot.slane %v114, 2
  %v364 = vrot.slane %v115, 2
  %v365 = vsel %vm335, %v363, %v364
  %v366 = vrot.slane %v116, 2
  %v367 = vrot.slane %v117, 2
  %v368 = vsel %vm335, %v366, %v367
  %v369 = vrot.slane %v118, 2
  %v370 = vrot.slane %v119, 2
  %v371 = vsel %vm335, %v369, %v370
  %v372 = vrot.slane %v120, 2
  %v373 = vrot.slane %v121, 2
  %v374 = vsel %vm335, %v372, %v373
  %v375 = vrot.slane %v122, 2
  %v376 = vrot.slane %v123, 2
  %v377 = vsel %vm335, %v375, %v376
  %v406 = vmax.f32 %v307, %v338
  %v407 = vmax.f32 %v308, %v337
  %v408 = vmax.f32 %v309, %v341
  %v409 = vmax.f32 %v310, %v340
  %v410 = vmax.f32 %v311, %v344
  %v411 = vmax.f32 %v312, %v343
  %v412 = vmax.f32 %v313, %v347
  %v413 = vmax.f32 %v314, %v346
  %v414 = vmax.f32 %v315, %v350
  %v415 = vmax.f32 %v316, %v349
  %v416 = vmax.f32 %v317, %v353
  %v417 = vmax.f32 %v318, %v352
  %v418 = vmax.f32 %v319, %v356
  %v419 = vmax.f32 %v320, %v355
  %v420 = vmax.f32 %v321, %v359
  %v421 = vmax.f32 %v322, %v358
  %v422 = vmax.f32 %v323, %v362
  %v423 = vmax.f32 %v324, %v361
  %v424 = vmax.f32 %v325, %v365
  %v425 = vmax.f32 %v326, %v364
  %v426 = vmax.f32 %v327, %v368
  %v427 = vmax.f32 %v328, %v367
  %v428 = vmax.f32 %v329, %v371
  %v429 = vmax.f32 %v330, %v370
  %v430 = vmax.f32 %v331, %v374
  %v431 = vmax.f32 %v332, %v373
  %v432 = vmax.f32 %v333, %v377
  %v433 = vmax.f32 %v334, %v376
  %v462 = vrot.slane %v180, 1
  %v463 = vrot.slane %v181, 1
  %v464 = vsel %vm236, %v462, %v463
  %v465 = vrot.slane %v182, 1
  %v466 = vrot.slane %v183, 1
  %v467 = vsel %vm236, %v465, %v466
  %v468 = vrot.slane %v184, 1
  %v469 = vrot.slane %v185, 1
  %v470 = vsel %vm236, %v468, %v469
  %v471 = vrot.slane %v186, 1
  %v472 = vrot.slane %v187, 1
  %v473 = vsel %vm236, %v471, %v472
  %v474 = vrot.slane %v188, 1
  %v475 = vrot.slane %v189, 1
  %v476 = vsel %vm236, %v474, %v475
  %v477 = vrot.slane %v190, 1
  %v478 = vrot.slane %v191, 1
  %v479 = vsel %vm236, %v477, %v478
  %v480 = vrot.slane %v192, 1
  %v481 = vrot.slane %v193, 1
  %v482 = vsel %vm236, %v480, %v481
  %v483 = vrot.slane %v194, 1
  %v484 = vrot.slane %v195, 1
  %v485 = vsel %vm236, %v483, %v484
  %v486 = vrot.slane %v196, 1
  %v487 = vrot.slane %v197, 1
  %v488 = vsel %vm236, %v486, %v487
  %v489 = vrot.slane %v198, 1
  %v490 = vrot.slane %v199, 1
  %v491 = vsel %vm236, %v489, %v490
  %v492 = vrot.slane %v200, 1
  %v493 = vrot.slane %v201, 1
  %v494 = vsel %vm236, %v492, %v493
  %v495 = vrot.slane %v202, 1
  %v496 = vrot.slane %v203, 1
  %v497 = vsel %vm236, %v495, %v496
  %v498 = vrot.slane %v204, 1
  %v499 = vrot.slane %v205, 1
  %v500 = vsel %vm236, %v498, %v499
  %v501 = vrot.slane %v206, 1
  %v502 = vrot.slane %v207, 1
  %v503 = vsel %vm236, %v501, %v502
  %v532 = vmin.f32 %v180, %v464
  %v533 = vmin.f32 %v181, %v463
  %v534 = vmin.f32 %v182, %v467
  %v535 = vmin.f32 %v183, %v466
  %v536 = vmin.f32 %v184, %v470
  %v537 = vmin.f32 %v185, %v469
  %v538 = vmin.f32 %v186, %v473
  %v539 = vmin.f32 %v187, %v472
  %v540 = vmin.f32 %v188, %v476
  %v541 = vmin.f32 %v189, %v475
  %v542 = vmin.f32 %v190, %v479
  %v543 = vmin.f32 %v191, %v478
  %v544 = vmin.f32 %v192, %v482
  %v545 = vmin.f32 %v193, %v481
  %v546 = vmin.f32 %v194, %v485
  %v547 = vmin.f32 %v195, %v484
  %v548 = vmin.f32 %v196, %v488
  %v549 = vmin.f32 %v197, %v487
  %v550 = vmin.f32 %v198, %v491
  %v551 = vmin.f32 %v199, %v490
  %v552 = vmin.f32 %v200, %v494
  %v553 = vmin.f32 %v201, %v493
  %v554 = vmin.f32 %v202, %v497
  %v555 = vmin.f32 %v203, %v496
  %v556 = vmin.f32 %v204, %v500
  %v557 = vmin.f32 %v205, %v499
  %v558 = vmin.f32 %v206, %v503
  %v559 = vmin.f32 %v207, %v502
  %v560 = vrot.slane %v180, 2
  %v561 = vrot.slane %v181, 2
  %v562 = vsel %vm335, %v560, %v561
  %v563 = vrot.slane %v182, 2
  %v564 = vrot.slane %v183, 2
  %v565 = vsel %vm335, %v563, %v564
  %v566 = vrot.slane %v184, 2
  %v567 = vrot.slane %v185, 2
  %v568 = vsel %vm335, %v566, %v567
  %v569 = vrot.slane %v186, 2
  %v570 = vrot.slane %v187, 2
  %v571 = vsel %vm335, %v569, %v570
  %v572 = vrot.slane %v188, 2
  %v573 = vrot.slane %v189, 2
  %v574 = vsel %vm335, %v572, %v573
  %v575 = vrot.slane %v190, 2
  %v576 = vrot.slane %v191, 2
  %v577 = vsel %vm335, %v575, %v576
  %v578 = vrot.slane %v192, 2
  %v579 = vrot.slane %v193, 2
  %v580 = vsel %vm335, %v578, %v579
  %v581 = vrot.slane %v194, 2
  %v582 = vrot.slane %v195, 2
  %v583 = vsel %vm335, %v581, %v582
  %v584 = vrot.slane %v196, 2
  %v585 = vrot.slane %v197, 2
  %v586 = vsel %vm335, %v584, %v585
  %v587 = vrot.slane %v198, 2
  %v588 = vrot.slane %v199, 2
  %v589 = vsel %vm335, %v587, %v588
  %v590 = vrot.slane %v200, 2
  %v591 = vrot.slane %v201, 2
  %v592 = vsel %vm335, %v590, %v591
  %v593 = vrot.slane %v202, 2
  %v594 = vrot.slane %v203, 2
  %v595 = vsel %vm335, %v593, %v594
  %v596 = vrot.slane %v204, 2
  %v597 = vrot.slane %v205, 2
  %v598 = vsel %vm335, %v596, %v597
  %v599 = vrot.slane %v206, 2
  %v600 = vrot.slane %v207, 2
  %v601 = vsel %vm335, %v599, %v600
  %v630 = vmin.f32 %v532, %v562
  %v631 = vmin.f32 %v533, %v561
  %v632 = vmin.f32 %v534, %v565
  %v633 = vmin.f32 %v535, %v564
  %v634 = vmin.f32 %v536, %v568
  %v635 = vmin.f32 %v537, %v567
  %v636 = vmin.f32 %v538, %v571
  %v637 = vmin.f32 %v539, %v570
  %v638 = vmin.f32 %v540, %v574
  %v639 = vmin.f32 %v541, %v573
  %v640 = vmin.f32 %v542, %v577
  %v641 = vmin.f32 %v543, %v576
  %v642 = vmin.f32 %v544, %v580
  %v643 = vmin.f32 %v545, %v579
  %v644 = vmin.f32 %v546, %v583
  %v645 = vmin.f32 %v547, %v582
  %v646 = vmin.f32 %v548, %v586
  %v647 = vmin.f32 %v549, %v585
  %v648 = vmin.f32 %v550, %v589
  %v649 = vmin.f32 %v551, %v588
  %v650 = vmin.f32 %v552, %v592
  %v651 = vmin.f32 %v553, %v591
  %v652 = vmin.f32 %v554, %v595
  %v653 = vmin.f32 %v555, %v594
  %v654 = vmin.f32 %v556, %v598
  %v655 = vmin.f32 %v557, %v597
  %v656 = vmin.f32 %v558, %v601
  %v657 = vmin.f32 %v559, %v600
  %v686 = vrot.slane %v152, 1
  %v687 = vrot.slane %v153, 1
  %v688 = vsel %vm236, %v686, %v687
  %v689 = vrot.slane %v154, 1
  %v690 = vrot.slane %v155, 1
  %v691 = vsel %vm236, %v689, %v690
  %v692 = vrot.slane %v156, 1
  %v693 = vrot.slane %v157, 1
  %v694 = vsel %vm236, %v692, %v693
  %v695 = vrot.slane %v158, 1
  %v696 = vrot.slane %v159, 1
  %v697 = vsel %vm236, %v695, %v696
  %v698 = vrot.slane %v160, 1
  %v699 = vrot.slane %v161, 1
  %v700 = vsel %vm236, %v698, %v699
  %v701 = vrot.slane %v162, 1
  %v702 = vrot.slane %v163, 1
  %v703 = vsel %vm236, %v701, %v702
  %v704 = vrot.slane %v164, 1
  %v705 = vrot.slane %v165, 1
  %v706 = vsel %vm236, %v704, %v705
  %v707 = vrot.slane %v166, 1
  %v708 = vrot.slane %v167, 1
  %v709 = vsel %vm236, %v707, %v708
  %v710 = vrot.slane %v168, 1
  %v711 = vrot.slane %v169, 1
  %v712 = vsel %vm236, %v710, %v711
  %v713 = vrot.slane %v170, 1
  %v714 = vrot.slane %v171, 1
  %v715 = vsel %vm236, %v713, %v714
  %v716 = vrot.slane %v172, 1
  %v717 = vrot.slane %v173, 1
  %v718 = vsel %vm236, %v716, %v717
  %v719 = vrot.slane %v174, 1
  %v720 = vrot.slane %v175, 1
  %v721 = vsel %vm236, %v719, %v720
  %v722 = vrot.slane %v176, 1
  %v723 = vrot.slane %v177, 1
  %v724 = vsel %vm236, %v722, %v723
  %v725 = vrot.slane %v178, 1
  %v726 = vrot.slane %v179, 1
  %v727 = vsel %vm236, %v725, %v726
  %v756 = vmin.f32 %v152, %v688
  %v757 = vmin.f32 %v153, %v687
  %v758 = vmin.f32 %v154, %v691
  %v759 = vmin.f32 %v155, %v690
  %v760 = vmin.f32 %v156, %v694
  %v761 = vmin.f32 %v157, %v693
  %v762 = vmin.f32 %v158, %v697
  %v763 = vmin.f32 %v159, %v696
  %v764 = vmin.f32 %v160, %v700
  %v765 = vmin.f32 %v161, %v699
  %v766 = vmin.f32 %v162, %v703
  %v767 = vmin.f32 %v163, %v702
  %v768 = vmin.f32 %v164, %v706
  %v769 = vmin.f32 %v165, %v705
  %v770 = vmin.f32 %v166, %v709
  %v771 = vmin.f32 %v167, %v708
  %v772 = vmin.f32 %v168, %v712
  %v773 = vmin.f32 %v169, %v711
  %v774 = vmin.f32 %v170, %v715
  %v775 = vmin.f32 %v171, %v714
  %v776 = vmin.f32 %v172, %v718
  %v777 = vmin.f32 %v173, %v717
  %v778 = vmin.f32 %v174, %v721
  %v779 = vmin.f32 %v175, %v720
  %v780 = vmin.f32 %v176, %v724
  %v781 = vmin.f32 %v177, %v723
  %v782 = vmin.f32 %v178, %v727
  %v783 = vmin.f32 %v179, %v726
  %v784 = vmax.f32 %v152, %v688
  %v785 = vmax.f32 %v153, %v687
  %v786 = vmax.f32 %v154, %v691
  %v787 = vmax.f32 %v155, %v690
  %v788 = vmax.f32 %v156, %v694
  %v789 = vmax.f32 %v157, %v693
  %v790 = vmax.f32 %v158, %v697
  %v791 = vmax.f32 %v159, %v696
  %v792 = vmax.f32 %v160, %v700
  %v793 = vmax.f32 %v161, %v699
  %v794 = vmax.f32 %v162, %v703
  %v795 = vmax.f32 %v163, %v702
  %v796 = vmax.f32 %v164, %v706
  %v797 = vmax.f32 %v165, %v705
  %v798 = vmax.f32 %v166, %v709
  %v799 = vmax.f32 %v167, %v708
  %v800 = vmax.f32 %v168, %v712
  %v801 = vmax.f32 %v169, %v711
  %v802 = vmax.f32 %v170, %v715
  %v803 = vmax.f32 %v171, %v714
  %v804 = vmax.f32 %v172, %v718
  %v805 = vmax.f32 %v173, %v717
  %v806 = vmax.f32 %v174, %v721
  %v807 = vmax.f32 %v175, %v720
  %v808 = vmax.f32 %v176, %v724
  %v809 = vmax.f32 %v177, %v723
  %v810 = vmax.f32 %v178, %v727
  %v811 = vmax.f32 %v179, %v726
  %v812 = vrot.slane %v152, 2
  %v813 = vrot.slane %v153, 2
  %v814 = vsel %vm335, %v812, %v813
  %v815 = vrot.slane %v154, 2
  %v816 = vrot.slane %v155, 2
  %v817 = vsel %vm335, %v815, %v816
  %v818 = vrot.slane %v156, 2
  %v819 = vrot.slane %v157, 2
  %v820 = vsel %vm335, %v818, %v819
  %v821 = vrot.slane %v158, 2
  %v822 = vrot.slane %v159, 2
  %v823 = vsel %vm335, %v821, %v822
  %v824 = vrot.slane %v160, 2
  %v825 = vrot.slane %v161, 2
  %v826 = vsel %vm335, %v824, %v825
  %v827 = vrot.slane %v162, 2
  %v828 = vrot.slane %v163, 2
  %v829 = vsel %vm335, %v827, %v828
  %v830 = vrot.slane %v164, 2
  %v831 = vrot.slane %v165, 2
  %v832 = vsel %vm335, %v830, %v831
  %v833 = vrot.slane %v166, 2
  %v834 = vrot.slane %v167, 2
  %v835 = vsel %vm335, %v833, %v834
  %v836 = vrot.slane %v168, 2
  %v837 = vrot.slane %v169, 2
  %v838 = vsel %vm335, %v836, %v837
  %v839 = vrot.slane %v170, 2
  %v840 = vrot.slane %v171, 2
  %v841 = vsel %vm335, %v839, %v840
  %v842 = vrot.slane %v172, 2
  %v843 = vrot.slane %v173, 2
  %v844 = vsel %vm335, %v842, %v843
  %v845 = vrot.slane %v174, 2
  %v846 = vrot.slane %v175, 2
  %v847 = vsel %vm335, %v845, %v846
  %v848 = vrot.slane %v176, 2
  %v849 = vrot.slane %v177, 2
  %v850 = vsel %vm335, %v848, %v849
  %v851 = vrot.slane %v178, 2
  %v852 = vrot.slane %v179, 2
  %v853 = vsel %vm335, %v851, %v852
  %v882 = vmin.f32 %v784, %v814
  %v883 = vmin.f32 %v785, %v813
  %v884 = vmin.f32 %v786, %v817
  %v885 = vmin.f32 %v787, %v816
  %v886 = vmin.f32 %v788, %v820
  %v887 = vmin.f32 %v789, %v819
  %v888 = vmin.f32 %v790, %v823
  %v889 = vmin.f32 %v791, %v822
  %v890 = vmin.f32 %v792, %v826
  %v891 = vmin.f32 %v793, %v825
  %v892 = vmin.f32 %v794, %v829
  %v893 = vmin.f32 %v795, %v828
  %v894 = vmin.f32 %v796, %v832
  %v895 = vmin.f32 %v797, %v831
  %v896 = vmin.f32 %v798, %v835
  %v897 = vmin.f32 %v799, %v834
  %v898 = vmin.f32 %v800, %v838
  %v899 = vmin.f32 %v801, %v837
  %v900 = vmin.f32 %v802, %v841
  %v901 = vmin.f32 %v803, %v840
  %v902 = vmin.f32 %v804, %v844
  %v903 = vmin.f32 %v805, %v843
  %v904 = vmin.f32 %v806, %v847
  %v905 = vmin.f32 %v807, %v846
  %v906 = vmin.f32 %v808, %v850
  %v907 = vmin.f32 %v809, %v849
  %v908 = vmin.f32 %v810, %v853
  %v909 = vmin.f32 %v811, %v852
  %v910 = vmax.f32 %v756, %v882
  %v911 = vmax.f32 %v757, %v883
  %v912 = vmax.f32 %v758, %v884
  %v913 = vmax.f32 %v759, %v885
  %v914 = vmax.f32 %v760, %v886
  %v915 = vmax.f32 %v761, %v887
  %v916 = vmax.f32 %v762, %v888
  %v917 = vmax.f32 %v763, %v889
  %v918 = vmax.f32 %v764, %v890
  %v919 = vmax.f32 %v765, %v891
  %v920 = vmax.f32 %v766, %v892
  %v921 = vmax.f32 %v767, %v893
  %v922 = vmax.f32 %v768, %v894
  %v923 = vmax.f32 %v769, %v895
  %v924 = vmax.f32 %v770, %v896
  %v925 = vmax.f32 %v771, %v897
  %v926 = vmax.f32 %v772, %v898
  %v927 = vmax.f32 %v773, %v899
  %v928 = vmax.f32 %v774, %v900
  %v929 = vmax.f32 %v775, %v901
  %v930 = vmax.f32 %v776, %v902
  %v931 = vmax.f32 %v777, %v903
  %v932 = vmax.f32 %v778, %v904
  %v933 = vmax.f32 %v779, %v905
  %v934 = vmax.f32 %v780, %v906
  %v935 = vmax.f32 %v781, %v907
  %v936 = vmax.f32 %v782, %v908
  %v937 = vmax.f32 %v783, %v909
  %v938 = vmin.f32 %v406, %v910
  %v939 = vmin.f32 %v407, %v911
  %v940 = vmin.f32 %v408, %v912
  %v941 = vmin.f32 %v409, %v913
  %v942 = vmin.f32 %v410, %v914
  %v943 = vmin.f32 %v411, %v915
  %v944 = vmin.f32 %v412, %v916
  %v945 = vmin.f32 %v413, %v917
  %v946 = vmin.f32 %v414, %v918
  %v947 = vmin.f32 %v415, %v919
  %v948 = vmin.f32 %v416, %v920
  %v949 = vmin.f32 %v417, %v921
  %v950 = vmin.f32 %v418, %v922
  %v951 = vmin.f32 %v419, %v923
  %v952 = vmin.f32 %v420, %v924
  %v953 = vmin.f32 %v421, %v925
  %v954 = vmin.f32 %v422, %v926
  %v955 = vmin.f32 %v423, %v927
  %v956 = vmin.f32 %v424, %v928
  %v957 = vmin.f32 %v425, %v929
  %v958 = vmin.f32 %v426, %v930
  %v959 = vmin.f32 %v427, %v931
  %v960 = vmin.f32 %v428, %v932
  %v961 = vmin.f32 %v429, %v933
  %v962 = vmin.f32 %v430, %v934
  %v963 = vmin.f32 %v431, %v935
  %v964 = vmin.f32 %v432, %v936
  %v965 = vmin.f32 %v433, %v937
  %v966 = vmax.f32 %v406, %v910
  %v967 = vmax.f32 %v407, %v911
  %v968 = vmax.f32 %v408, %v912
  %v969 = vmax.f32 %v409, %v913
  %v970 = vmax.f32 %v410, %v914
  %v971 = vmax.f32 %v411, %v915
  %v972 = vmax.f32 %v412, %v916
  %v973 = vmax.f32 %v413, %v917
  %v974 = vmax.f32 %v414, %v918
  %v975 = vmax.f32 %v415, %v919
  %v976 = vmax.f32 %v416, %v920
  %v977 = vmax.f32 %v417, %v921
  %v978 = vmax.f32 %v418, %v922
  %v979 = vmax.f32 %v419, %v923
  %v980 = vmax.f32 %v420, %v924
  %v981 = vmax.f32 %v421, %v925
  %v982 = vmax.f32 %v422, %v926
  %v983 = vmax.f32 %v423, %v927
  %v984 = vmax.f32 %v424, %v928
  %v985 = vmax.f32 %v425, %v929
  %v986 = vmax.f32 %v426, %v930
  %v987 = vmax.f32 %v427, %v931
  %v988 = vmax.f32 %v428, %v932
  %v989 = vmax.f32 %v429, %v933
  %v990 = vmax.f32 %v430, %v934
  %v991 = vmax.f32 %v431, %v935
  %v992 = vmax.f32 %v432, %v936
  %v993 = vmax.f32 %v433, %v937
  %v994 = vmin.f32 %v966, %v630
  %v995 = vmin.f32 %v967, %v631
  %v996 = vmin.f32 %v968, %v632
  %v997 = vmin.f32 %v969, %v633
  %v998 = vmin.f32 %v970, %v634
  %v999 = vmin.f32 %v971, %v635
  %v1000 = vmin.f32 %v972, %v636
  %v1001 = vmin.f32 %v973, %v637
  %v1002 = vmin.f32 %v974, %v638
  %v1003 = vmin.f32 %v975, %v639
  %v1004 = vmin.f32 %v976, %v640
  %v1005 = vmin.f32 %v977, %v641
  %v1006 = vmin.f32 %v978, %v642
  %v1007 = vmin.f32 %v979, %v643
  %v1008 = vmin.f32 %v980, %v644
  %v1009 = vmin.f32 %v981, %v645
  %v1010 = vmin.f32 %v982, %v646
  %v1011 = vmin.f32 %v983, %v647
  %v1012 = vmin.f32 %v984, %v648
  %v1013 = vmin.f32 %v985, %v649
  %v1014 = vmin.f32 %v986, %v650
  %v1015 = vmin.f32 %v987, %v651
  %v1016 = vmin.f32 %v988, %v652
  %v1017 = vmin.f32 %v989, %v653
  %v1018 = vmin.f32 %v990, %v654
  %v1019 = vmin.f32 %v991, %v655
  %v1020 = vmin.f32 %v992, %v656
  %v1021 = vmin.f32 %v993, %v657
  %v1022 = vmax.f32 %v938, %v994
  %v1023 = vmax.f32 %v939, %v995
  %v1024 = vmax.f32 %v940, %v996
  %v1025 = vmax.f32 %v941, %v997
  %v1026 = vmax.f32 %v942, %v998
  %v1027 = vmax.f32 %v943, %v999
  %v1028 = vmax.f32 %v944, %v1000
  %v1029 = vmax.f32 %v945, %v1001
  %v1030 = vmax.f32 %v946, %v1002
  %v1031 = vmax.f32 %v947, %v1003
  %v1032 = vmax.f32 %v948, %v1004
  %v1033 = vmax.f32 %v949, %v1005
  %v1034 = vmax.f32 %v950, %v1006
  %v1035 = vmax.f32 %v951, %v1007
  %v1036 = vmax.f32 %v952, %v1008
  %v1037 = vmax.f32 %v953, %v1009
  %v1038 = vmax.f32 %v954, %v1010
  %v1039 = vmax.f32 %v955, %v1011
  %v1040 = vmax.f32 %v956, %v1012
  %v1041 = vmax.f32 %v957, %v1013
  %v1042 = vmax.f32 %v958, %v1014
  %v1043 = vmax.f32 %v959, %v1015
  %v1044 = vmax.f32 %v960, %v1016
  %v1045 = vmax.f32 %v961, %v1017
  %v1046 = vmax.f32 %v962, %v1018
  %v1047 = vmax.f32 %v963, %v1019
  %v1048 = vmax.f32 %v964, %v1020
  %v1049 = vmax.f32 %v965, %v1021
  %vm1050 = vcmask 64512
  %1051 = vst.msk [vmem:[%s1] sm:$0xff] %vm1050, %v1022
  %vm1052 = vcmask 62464
  %1053 = vst.msk [vmem:[%s1 + $0x8] sm:$0x3f] %vm1052, %v1023
  %1054 = vst.msk [vmem:[%s1 + $0x10] sm:$0xff] %vm1050, %v1024
  %1055 = vst.msk [vmem:[%s1 + $0x18] sm:$0x3f] %vm1052, %v1025
  %1056 = vst.msk [vmem:[%s1 + $0x20] sm:$0xff] %vm1050, %v1026
  %1057 = vst.msk [vmem:[%s1 + $0x28] sm:$0x3f] %vm1052, %v1027
  %1058 = vst.msk [vmem:[%s1 + $0x30] sm:$0xff] %vm1050, %v1028
  %1059 = vst.msk [vmem:[%s1 + $0x38] sm:$0x3f] %vm1052, %v1029
  %1060 = vst.msk [vmem:[%s1 + $0x40] sm:$0xff] %vm1050, %v1030
  %1061 = vst.msk [vmem:[%s1 + $0x48] sm:$0x3f] %vm1052, %v1031
  %1062 = vst.msk [vmem:[%s1 + $0x50] sm:$0xff] %vm1050, %v1032
  %1063 = vst.msk [vmem:[%s1 + $0x58] sm:$0x3f] %vm1052, %v1033
  %1064 = vst.msk [vmem:[%s1 + $0x60] sm:$0xff] %vm1050, %v1034
  %1065 = vst.msk [vmem:[%s1 + $0x68] sm:$0x3f] %vm1052, %v1035
  %1066 = vst.msk [vmem:[%s1 + $0x70] sm:$0xff] %vm1050, %v1036
  %1067 = vst.msk [vmem:[%s1 + $0x78] sm:$0x3f] %vm1052, %v1037
  %1068 = vst.msk [vmem:[%s1 + $0x80] sm:$0xff] %vm1050, %v1038
  %1069 = vst.msk [vmem:[%s1 + $0x88] sm:$0x3f] %vm1052, %v1039
  %1070 = vst.msk [vmem:[%s1 + $0x90] sm:$0xff] %vm1050, %v1040
  %1071 = vst.msk [vmem:[%s1 + $0x98] sm:$0x3f] %vm1052, %v1041
  %1072 = vst.msk [vmem:[%s1 + $0xa0] sm:$0xff] %vm1050, %v1042
  %1073 = vst.msk [vmem:[%s1 + $0xa8] sm:$0x3f] %vm1052, %v1043
  %1074 = vst.msk [vmem:[%s1 + $0xb0] sm:$0xff] %vm1050, %v1044
  %1075 = vst.msk [vmem:[%s1 + $0xb8] sm:$0x3f] %vm1052, %v1045
  %1076 = vst.msk [vmem:[%s1 + $0xc0] sm:$0xff] %vm1050, %v1046
  %1077 = vst.msk [vmem:[%s1 + $0xc8] sm:$0x3f] %vm1052, %v1047
  %1078 = vst.msk [vmem:[%s1 + $0xd0] sm:$0xff] %vm1050, %v1048
  %1079 = vst.msk [vmem:[%s1 + $0xd8] sm:$0x3f] %vm1052, %v1049
  // Predicated region
  $region6: #{tpu_custom_call.1} parent=0 // pred_check
    _
  $region7: #{tpu_custom_call.1} parent=0 // pred_check_branch
    %1081 = sbr.rel (0) target = $region9
  $region8: #{tpu_custom_call.1} parent=0 // pred_region
    _
  $region9: #{tpu_custom_call.1} parent=0 // pred_fallthru
    _
  // Predicated region
  $region10: #{tpu_custom_call.1} parent=0 // pred_check
    _
  $region11: #{tpu_custom_call.1} parent=0 // pred_check_branch
    %1083 = sbr.rel (0) target = $region13
  $region12: #{tpu_custom_call.1} parent=0 // pred_region
    _
  $region13: #{tpu_custom_call.1} parent=0 // pred_fallthru
    _

</llo_original>
